<compile_context>
chip_gen: v7x
topology: tpu7x:2x2x1
jax: 0.10.0
libtpu: 0.0.40
codegen_flags: <defaults>
</compile_context>

<pallas_src>
import jax
import jax.numpy as jnp
from jax import lax
from jax.experimental import pallas as pl
from jax.experimental.pallas import tpu as pltpu

INPUT_SIZE = 11
HIDDEN_SIZES = [128, 64]
OUTPUT_SIZE = 7
BN_EPS = 1e-5

SLAB = 128      # lanes per in-kernel sub-tile (keeps intermediates within the 64-vreg file)
TB_MAX = 4096   # batch-tile (lane) width; multiple of SLAB; small VMEM footprint on v5e/v6e/v7x


def _round_up(x, m):
    return ((x + m - 1) // m) * m


def _pick_tile(B, tb_max=TB_MAX):
    """Batch-tile width. Multiple of SLAB for B>1024 (and >=2 grid steps for v7x megacore)."""
    if B <= 1024:
        return B                                   # single step; block == full batch dim
    return max(SLAB, min(tb_max, _round_up(pl.cdiv(B, 2), SLAB)))


def _use_bf16_relu():
    """bf16 VALU exists on v6e/v7x; keep f32 ReLU on older chips (v5e has no bf16 VALU)."""
    try:
        kind = jax.devices()[0].device_kind.lower()
    except Exception:
        return False
    return ("v6" in kind) or ("v7" in kind) or ("7x" in kind)


def _make_kernel(slab, n_slabs, bf16_relu):
    def kernel(x_ref, w1_ref, b1_ref, w2_ref, b2_ref, w3_ref, b3_ref, o_ref):
        # x_ref : (TB, 11) f32 (batch-major, as supplied by the caller)
        # w1    : (128, 11) bf16   b1 : (128, 1) f32
        # w2    : (64, 128) bf16   b2 : (64, 1)  f32   (BN1 folded in)
        # w3    : (7, 64)   bf16   b3 : (7, 1)   f32   (BN2 folded in)
        # o_ref : (7, TB) f32 (feature-major, batch on lanes)

        # Hoist resident weight/bias loads out of the (unrolled) slab loop.
        w1 = w1_ref[...]
        b1 = b1_ref[...]
        w2 = w2_ref[...]
        b2 = b2_ref[...]
        w3 = w3_ref[...]
        b3 = b3_ref[...]

        def relu_bf16(h):
            if bf16_relu:
                return jnp.maximum(h.astype(jnp.bfloat16), 0)      # packed bf16 max (v6e/v7x)
            return jnp.maximum(h, 0.0).astype(jnp.bfloat16)         # f32 max, then cast (v5e)

        for s in range(n_slabs):                  # trace-time unrolled sub-tile loop
            lo = s * slab
            xs = x_ref[lo:lo + slab, :].astype(jnp.bfloat16)         # (slab, 11)

            # Layer 1 (feature-major): contract last dims -> (128, slab); Dropout = identity.
            h = lax.dot_general(w1, xs, (((1,), (1,)), ((), ())),
                                preferred_element_type=jnp.float32) + b1
            h = relu_bf16(h)                                          # (128, slab) bf16

            # Layer 2 (BN1 folded): (64,128) @ (128,slab) -> (64, slab)
            h = jnp.dot(w2, h, preferred_element_type=jnp.float32) + b2
            h = relu_bf16(h)                                          # (64, slab) bf16

            # Output layer (BN2 folded): (7,64) @ (64,slab) -> (7, slab), lane-dense store.
            out = jnp.dot(w3, h, preferred_element_type=jnp.float32) + b3
            o_ref[:, lo:lo + slab] = out.astype(o_ref.dtype)

    return kernel


def chapman_predictor_forward_fm(x, params, tb_max=TB_MAX):
    """x: (B, 11) f32 batch-major. Returns the FEATURE-MAJOR output (7, B) f32 (lane-dense)."""
    B = x.shape[0]
    h1, h2 = HIDDEN_SIZES
    TB = _pick_tile(B, tb_max)
    grid = (pl.cdiv(B, TB),)

    if TB % SLAB == 0 and TB >= SLAB:
        slab, n_slabs = SLAB, TB // SLAB
    else:
        slab, n_slabs = TB, 1

    # --- trace-time param prep: fold BN affine (f32) into the next Linear, cast MXU operands
    # --- to bf16 ONCE; biases stay f32 and are added after f32 accumulation.
    f32 = jnp.float32
    s1 = params["g1"] / jnp.sqrt(params["rv1"] + BN_EPS)          # (1, 128)
    t1 = params["be1"] - params["rm1"] * s1
    s2 = params["g2"] / jnp.sqrt(params["rv2"] + BN_EPS)          # (1, 64)
    t2 = params["be2"] - params["rm2"] * s2

    w1t = params["w1"].astype(f32).T.astype(jnp.bfloat16)          # (128, 11)
    b1c = params["b1"].astype(f32).T                               # (128, 1)
    w2f = s1.reshape(-1, 1) * params["w2"]                         # (128, 64) f32
    b2f = t1 @ params["w2"] + params["b2"]                         # (1, 64)
    w2t = w2f.T.astype(jnp.bfloat16)                               # (64, 128)
    b2c = b2f.T                                                    # (64, 1)
    w3f = s2.reshape(-1, 1) * params["w3"]                         # (64, 7) f32
    b3f = t2 @ params["w3"] + params["b3"]                         # (1, 7)
    w3t = w3f.T.astype(jnp.bfloat16)                               # (7, 64)
    b3c = b3f.T                                                    # (7, 1)

    def resident(shape):
        # constant index_map -> block fetched once, kept VMEM-resident across grid steps
        return pl.BlockSpec(shape, lambda i: (0, 0))

    in_specs = [
        pl.BlockSpec((TB, INPUT_SIZE), lambda i: (i, 0)),          # x: tiled over batch
        resident((h1, INPUT_SIZE)), resident((h1, 1)),             # w1^T, b1
        resident((h2, h1)),         resident((h2, 1)),             # w2'^T, b2'
        resident((OUTPUT_SIZE, h2)), resident((OUTPUT_SIZE, 1)),   # w3'^T, b3'
    ]
    out_specs = pl.BlockSpec((OUTPUT_SIZE, TB), lambda i: (0, i))  # lane-dense output

    flops = 2 * B * (INPUT_SIZE * h1 + h1 * h2 + h2 * OUTPUT_SIZE)
    weight_bytes = (INPUT_SIZE * h1 + h1 * h2 + h2 * OUTPUT_SIZE) * 2 \
                   + (h1 + h2 + OUTPUT_SIZE) * 4
    bytes_accessed = B * (INPUT_SIZE + OUTPUT_SIZE) * 4 + weight_bytes
    cost = pl.CostEstimate(flops=flops, transcendentals=0, bytes_accessed=bytes_accessed)

    return pl.pallas_call(
        _make_kernel(slab, n_slabs, _use_bf16_relu()),
        out_shape=jax.ShapeDtypeStruct((OUTPUT_SIZE, B), jnp.float32),
        grid=grid,
        in_specs=in_specs,
        out_specs=out_specs,
        compiler_params=pltpu.CompilerParams(dimension_semantics=("parallel",)),
        cost_estimate=cost,
    )(x, w1t, b1c, w2t, b2c, w3t, b3c)


def chapman_predictor_forward(x, params, tb_max=TB_MAX):
    """Drop-in PyTorch-shaped entry point: x (B, 11) f32 -> (B, 7) f32.

    The transpose back to batch-major is layout plumbing outside the kernel; callers that can
    consume feature-major (7, B) should use chapman_predictor_forward_fm directly (and jit the
    whole thing so the BN fold happens once at trace time).
    """
    return chapman_predictor_forward_fm(x, params, tb_max).T


def init_params(key):
    """Deterministic synthetic parameters matching the PyTorch module's shapes (eval mode)."""
    ks = jax.random.split(key, 6)
    f32 = jnp.float32

    def lin(k, fan_in, fan_out):
        bound = 1.0 / jnp.sqrt(f32(fan_in))
        kw, kb = jax.random.split(k)
        w = jax.random.uniform(kw, (fan_in, fan_out), f32, -bound, bound)
        b = jax.random.uniform(kb, (1, fan_out), f32, -bound, bound)
        return w, b

    w1, b1 = lin(ks[0], INPUT_SIZE, HIDDEN_SIZES[0])
    w2, b2 = lin(ks[1], HIDDEN_SIZES[0], HIDDEN_SIZES[1])
    w3, b3 = lin(ks[2], HIDDEN_SIZES[1], OUTPUT_SIZE)

    # BatchNorm with non-trivial running stats so the folded path is genuinely exercised.
    def bn(k, n):
        kg, kb, km, kv = jax.random.split(k, 4)
        gamma = 1.0 + 0.1 * jax.random.normal(kg, (1, n), f32)
        beta = 0.1 * jax.random.normal(kb, (1, n), f32)
        running_mean = 0.2 * jax.random.normal(km, (1, n), f32)
        running_var = jax.random.uniform(kv, (1, n), f32, 0.5, 1.5)
        return gamma, beta, running_mean, running_var

    g1, be1, rm1, rv1 = bn(ks[3], HIDDEN_SIZES[0])
    g2, be2, rm2, rv2 = bn(ks[4], HIDDEN_SIZES[1])

    return dict(w1=w1, b1=b1, w2=w2, b2=b2, w3=w3, b3=b3,
                g1=g1, be1=be1, rm1=rm1, rv1=rv1,
                g2=g2, be2=be2, rm2=rm2, rv2=rv2)


def reference_forward(x, p):
    """Pure-JAX f32 reference with the ORIGINAL (unfolded) Linear->ReLU->BN ordering."""
    h = jnp.maximum(x @ p["w1"] + p["b1"], 0.0)
    h = (h - p["rm1"]) * (p["g1"] / jnp.sqrt(p["rv1"] + BN_EPS)) + p["be1"]
    h = jnp.maximum(h @ p["w2"] + p["b2"], 0.0)
    h = (h - p["rm2"]) * (p["g2"] / jnp.sqrt(p["rv2"] + BN_EPS)) + p["be2"]
    return h @ p["w3"] + p["b3"]


if __name__ == "__main__":
    key = jax.random.PRNGKey(0)
    kx, kp = jax.random.split(key)
    params = init_params(kp)

    # Small primary case (B=8, single slab) + a ragged multi-tile case (B=1300 -> grid=2,
    # partial last block) to exercise padding/masked writeback on the batch-lane axis.
    for B in (8, 1300):
        x = jax.random.normal(jax.random.fold_in(kx, B), (B, INPUT_SIZE), jnp.float32)
        out = jax.block_until_ready(chapman_predictor_forward(x, params))
        ref = reference_forward(x, params)
        assert out.shape == (B, OUTPUT_SIZE)
        # bf16 MXU operands with f32 accumulation -> loosened tolerance vs. the f32 reference.
        err = float(jnp.max(jnp.abs(out - ref)))
        assert jnp.allclose(out, ref, atol=5e-2, rtol=5e-2), f"B={B}: max abs err = {err}"

    print("KERNEL_OK")
</pallas_src>

<mosaic_0001>
module attributes {stable_mosaic.version = 11 : i64} {
  func.func @kernel(%arg0: i32, %arg1: memref<8x11xf32, #tpu.memory_space<vmem>>, %arg2: memref<128x11xbf16, #tpu.memory_space<vmem>>, %arg3: memref<128x1xf32, #tpu.memory_space<vmem>>, %arg4: memref<64x128xbf16, #tpu.memory_space<vmem>>, %arg5: memref<64x1xf32, #tpu.memory_space<vmem>>, %arg6: memref<7x64xbf16, #tpu.memory_space<vmem>>, %arg7: memref<7x1xf32, #tpu.memory_space<vmem>>, %arg8: memref<7x8xf32, #tpu.memory_space<vmem>>) attributes {dimension_semantics = [#tpu.dimension_semantics<parallel>], iteration_bounds = array<i64: 1>, scalar_prefetch = 0 : i64, scratch_operands = 0 : i64, tpu.core_type = #tpu.core_type<tc>, window_params = [{transform_indices = @transform_0, window_bounds = array<i64: 8, 11>}, {pipeline_mode = #tpu.pipeline_mode<synchronous>, transform_indices = @transform_1, window_bounds = array<i64: 128, 11>}, {pipeline_mode = #tpu.pipeline_mode<synchronous>, transform_indices = @transform_2, window_bounds = array<i64: 128, 1>}, {pipeline_mode = #tpu.pipeline_mode<synchronous>, transform_indices = @transform_3, window_bounds = array<i64: 64, 128>}, {pipeline_mode = #tpu.pipeline_mode<synchronous>, transform_indices = @transform_4, window_bounds = array<i64: 64, 1>}, {pipeline_mode = #tpu.pipeline_mode<synchronous>, transform_indices = @transform_5, window_bounds = array<i64: 7, 64>}, {pipeline_mode = #tpu.pipeline_mode<synchronous>, transform_indices = @transform_6, window_bounds = array<i64: 7, 1>}, {transform_indices = @transform_7, window_bounds = array<i64: 7, 8>}]} {
    %c0 = arith.constant 0 : index
    %c0_0 = arith.constant 0 : index
    %0 = vector.load %arg2[%c0, %c0_0] : memref<128x11xbf16, #tpu.memory_space<vmem>>, vector<128x11xbf16>
    %c0_1 = arith.constant 0 : index
    %c0_2 = arith.constant 0 : index
    %1 = vector.load %arg3[%c0_1, %c0_2] : memref<128x1xf32, #tpu.memory_space<vmem>>, vector<128x1xf32>
    %c0_3 = arith.constant 0 : index
    %c0_4 = arith.constant 0 : index
    %2 = vector.load %arg4[%c0_3, %c0_4] : memref<64x128xbf16, #tpu.memory_space<vmem>>, vector<64x128xbf16>
    %c0_5 = arith.constant 0 : index
    %c0_6 = arith.constant 0 : index
    %3 = vector.load %arg5[%c0_5, %c0_6] : memref<64x1xf32, #tpu.memory_space<vmem>>, vector<64x1xf32>
    %c0_7 = arith.constant 0 : index
    %c0_8 = arith.constant 0 : index
    %4 = vector.load %arg6[%c0_7, %c0_8] : memref<7x64xbf16, #tpu.memory_space<vmem>>, vector<7x64xbf16>
    %c0_9 = arith.constant 0 : index
    %c0_10 = arith.constant 0 : index
    %5 = vector.load %arg7[%c0_9, %c0_10] : memref<7x1xf32, #tpu.memory_space<vmem>>, vector<7x1xf32>
    %c0_11 = arith.constant 0 : index
    %c0_12 = arith.constant 0 : index
    %6 = vector.load %arg1[%c0_11, %c0_12] : memref<8x11xf32, #tpu.memory_space<vmem>>, vector<8x11xf32>
    %7 = arith.truncf %6 : vector<8x11xf32> to vector<8x11xbf16>
    %cst = arith.constant dense<0.000000e+00> : vector<128x8xf32>
    %8 = tpu.matmul %0, %7, %cst {dimension_numbers = #tpu.dot_dimension_numbers<[1], [1], [0], [0], [0, 0, 1, 0], [], []>} : vector<128x11xbf16>, vector<8x11xbf16>, vector<128x8xf32> -> vector<128x8xf32>
    %9 = vector.broadcast %1 : vector<128x1xf32> to vector<128x8xf32>
    %10 = arith.addf %8, %9 : vector<128x8xf32>
    %cst_13 = arith.constant 0.000000e+00 : f32
    %11 = vector.broadcast %cst_13 : f32 to vector<128x8xf32>
    %12 = arith.maximumf %10, %11 : vector<128x8xf32>
    %13 = arith.truncf %12 : vector<128x8xf32> to vector<128x8xbf16>
    %cst_14 = arith.constant dense<0.000000e+00> : vector<64x8xf32>
    %14 = tpu.matmul %2, %13, %cst_14 {dimension_numbers = #tpu.dot_dimension_numbers<[1], [0], [0], [1], [0, 0, 1, 1], [], []>} : vector<64x128xbf16>, vector<128x8xbf16>, vector<64x8xf32> -> vector<64x8xf32>
    %15 = vector.broadcast %3 : vector<64x1xf32> to vector<64x8xf32>
    %16 = arith.addf %14, %15 : vector<64x8xf32>
    %cst_15 = arith.constant 0.000000e+00 : f32
    %17 = vector.broadcast %cst_15 : f32 to vector<64x8xf32>
    %18 = arith.maximumf %16, %17 : vector<64x8xf32>
    %19 = arith.truncf %18 : vector<64x8xf32> to vector<64x8xbf16>
    %cst_16 = arith.constant dense<0.000000e+00> : vector<7x8xf32>
    %20 = tpu.matmul %4, %19, %cst_16 {dimension_numbers = #tpu.dot_dimension_numbers<[1], [0], [0], [1], [0, 0, 1, 1], [], []>} : vector<7x64xbf16>, vector<64x8xbf16>, vector<7x8xf32> -> vector<7x8xf32>
    %21 = vector.broadcast %5 : vector<7x1xf32> to vector<7x8xf32>
    %22 = arith.addf %20, %21 : vector<7x8xf32>
    %c0_17 = arith.constant 0 : index
    %c0_18 = arith.constant 0 : index
    %23 = vector.load %arg8[%c0_17, %c0_18] : memref<7x8xf32, #tpu.memory_space<vmem>>, vector<7x8xf32>
    tpu.vector_store %arg8[%c0_17, %c0_18], %22 {strides = array<i32>} : memref<7x8xf32, #tpu.memory_space<vmem>>, vector<7x8xf32>,
    return
  }
  func.func @transform_0(%arg0: i32) -> (i32, i32) {
    %c0_i32 = arith.constant 0 : i32
    %c0_i32_0 = arith.constant 0 : i32
    return %arg0, %c0_i32 : i32, i32
  }
  func.func @transform_1(%arg0: i32) -> (i32, i32) {
    %c0_i32 = arith.constant 0 : i32
    %c0_i32_0 = arith.constant 0 : i32
    %c0_i32_1 = arith.constant 0 : i32
    return %c0_i32, %c0_i32_0 : i32, i32
  }
  func.func @transform_2(%arg0: i32) -> (i32, i32) {
    %c0_i32 = arith.constant 0 : i32
    %c0_i32_0 = arith.constant 0 : i32
    %c0_i32_1 = arith.constant 0 : i32
    return %c0_i32, %c0_i32_0 : i32, i32
  }
  func.func @transform_3(%arg0: i32) -> (i32, i32) {
    %c0_i32 = arith.constant 0 : i32
    %c0_i32_0 = arith.constant 0 : i32
    %c0_i32_1 = arith.constant 0 : i32
    return %c0_i32, %c0_i32_0 : i32, i32
  }
  func.func @transform_4(%arg0: i32) -> (i32, i32) {
    %c0_i32 = arith.constant 0 : i32
    %c0_i32_0 = arith.constant 0 : i32
    %c0_i32_1 = arith.constant 0 : i32
    return %c0_i32, %c0_i32_0 : i32, i32
  }
  func.func @transform_5(%arg0: i32) -> (i32, i32) {
    %c0_i32 = arith.constant 0 : i32
    %c0_i32_0 = arith.constant 0 : i32
    %c0_i32_1 = arith.constant 0 : i32
    return %c0_i32, %c0_i32_0 : i32, i32
  }
  func.func @transform_6(%arg0: i32) -> (i32, i32) {
    %c0_i32 = arith.constant 0 : i32
    %c0_i32_0 = arith.constant 0 : i32
    %c0_i32_1 = arith.constant 0 : i32
    return %c0_i32, %c0_i32_0 : i32, i32
  }
  func.func @transform_7(%arg0: i32) -> (i32, i32) {
    %c0_i32 = arith.constant 0 : i32
    %c0_i32_0 = arith.constant 0 : i32
    return %c0_i32, %arg0 : i32, i32
  }
}

</mosaic_0001>

<llo_original>
// kernel: tpu_custom_call.1
$region0: #{tpu_custom_call.1}
  #allocation0 [shape = 'u32[]', space=smem, size = 0x4, offset = 0x4, fixed_abs, tag = 'smem constant byte address 0x4 - core index']
  #allocation1 [shape = 'u32[144,128]{1,0:T(1,128)}', space=vmem, size = 0x12000, scoped, tag = 'internal scratch']
  %s0 = inlined_call_operand.vmem [shape: f32[8,11], index: 0, kind: input, shape index: {}]
  %s1 = inlined_call_operand.vmem [shape: bf16[128,11], index: 1, kind: input, shape index: {}]
  %s2 = inlined_call_operand.vmem [shape: f32[128,1], index: 2, kind: input, shape index: {}]
  %s3 = inlined_call_operand.vmem [shape: bf16[64,128], index: 3, kind: input, shape index: {}]
  %s4 = inlined_call_operand.vmem [shape: f32[64,1], index: 4, kind: input, shape index: {}]
  %s5 = inlined_call_operand.vmem [shape: bf16[7,64], index: 5, kind: input, shape index: {}]
  %s6 = inlined_call_operand.vmem [shape: f32[7,1], index: 6, kind: input, shape index: {}]
  %s7 = inlined_call_operand.hbm [shape: f32[7,8], index: 7, kind: output, shape index: {}]
  %s8 = sld [smem:[#allocation0]]
  $region38: #{tpu_custom_call.1} parent=0
    _
  %s10 = ssub.s32 1, %s8
  %s11 = scalar_select 0, %s10, %s8
  $region1: #{tpu_custom_call.1} parent=0
    #allocation2 [shape = 'u8[4096]{0}', space=vmem, size = 0x1000, scoped, tag = 'output window, operand 0, single buffered']
    #allocation3 [shape = 's32[1]{0}', space=sflag, size = 0x4, scoped, tag = 'scoped memory for tpu_custom_call.1']
    %12 = vsyncpa [#allocation3], 0
    // Predicated region
    $region2: #{tpu_custom_call.1} parent=1 // pred_check
      _
    $region3: #{tpu_custom_call.1} parent=1 // pred_check_branch
      %14 = sbr.rel (0) target = $region5
    $region4: #{tpu_custom_call.1} parent=1 // pred_region
      _
    $region5: #{tpu_custom_call.1} parent=1 // pred_fallthru
      _
    // Predicated region
    $region6: #{tpu_custom_call.1} parent=1 // pred_check
      _
    $region7: #{tpu_custom_call.1} parent=1 // pred_check_branch
      %16 = sbr.rel (0) target = $region9
    $region8: #{tpu_custom_call.1} parent=1 // pred_region
      _
    $region9: #{tpu_custom_call.1} parent=1 // pred_fallthru
      _
    // Predicated region
    $region10: #{tpu_custom_call.1} parent=1 // pred_check
      _
    $region11: #{tpu_custom_call.1} parent=1 // pred_check_branch
      %18 = sbr.rel (0) target = $region13
    $region12: #{tpu_custom_call.1} parent=1 // pred_region
      _
    $region13: #{tpu_custom_call.1} parent=1 // pred_fallthru
      _
    // Predicated region
    $region14: #{tpu_custom_call.1} parent=1 // pred_check
      _
    $region15: #{tpu_custom_call.1} parent=1 // pred_check_branch
      %20 = sbr.rel (0) target = $region17
    $region16: #{tpu_custom_call.1} parent=1 // pred_region
      _
    $region17: #{tpu_custom_call.1} parent=1 // pred_fallthru
      _
    // Predicated region
    $region18: #{tpu_custom_call.1} parent=1 // pred_check
      _
    $region19: #{tpu_custom_call.1} parent=1 // pred_check_branch
      %22 = sbr.rel (0) target = $region21
    $region20: #{tpu_custom_call.1} parent=1 // pred_region
      _
    $region21: #{tpu_custom_call.1} parent=1 // pred_fallthru
      _
    // Predicated region
    $region22: #{tpu_custom_call.1} parent=1 // pred_check
      _
    $region23: #{tpu_custom_call.1} parent=1 // pred_check_branch
      %24 = sbr.rel (0) target = $region25
    $region24: #{tpu_custom_call.1} parent=1 // pred_region
      _
    $region25: #{tpu_custom_call.1} parent=1 // pred_fallthru
      _
    // Predicated region
    $region26: #{tpu_custom_call.1} parent=1 // pred_check
      _
    $region27: #{tpu_custom_call.1} parent=1 // pred_check_branch
      %26 = sbr.rel (0) target = $region29
    $region28: #{tpu_custom_call.1} parent=1 // pred_region
      _
    $region29: #{tpu_custom_call.1} parent=1 // pred_fallthru
      _
    %v28 = vld [vmem:[%s1] sm:$0xf]
    %v29 = vld [vmem:[%s1 + $0x4] sm:$0xf]
    %v30 = vld [vmem:[%s1 + $0x8] sm:$0xf]
    %v31 = vld [vmem:[%s1 + $0xc] sm:$0xf]
    %v32 = vld [vmem:[%s1 + $0x10] sm:$0xf]
    %v33 = vld [vmem:[%s1 + $0x14] sm:$0xf]
    %v34 = vld [vmem:[%s1 + $0x18] sm:$0xf]
    %v35 = vld [vmem:[%s1 + $0x1c] sm:$0xf]
    %v36 = vld [vmem:[%s1 + $0x20] sm:$0xf]
    %v37 = vld [vmem:[%s1 + $0x24] sm:$0xf]
    %v38 = vld [vmem:[%s1 + $0x28] sm:$0xf]
    %v39 = vld [vmem:[%s1 + $0x2c] sm:$0xf]
    %v40 = vld [vmem:[%s1 + $0x30] sm:$0xf]
    %v41 = vld [vmem:[%s1 + $0x34] sm:$0xf]
    %v42 = vld [vmem:[%s1 + $0x38] sm:$0xf]
    %v43 = vld [vmem:[%s1 + $0x3c] sm:$0xf]
    %v44 = vld [vmem:[%s2] sm:$0xff]
    %v45 = vld [vmem:[%s2 + $0x8] sm:$0xff]
    %v46 = vld [vmem:[%s2 + $0x10] sm:$0xff]
    %v47 = vld [vmem:[%s2 + $0x18] sm:$0xff]
    %v48 = vld [vmem:[%s2 + $0x20] sm:$0xff]
    %v49 = vld [vmem:[%s2 + $0x28] sm:$0xff]
    %v50 = vld [vmem:[%s2 + $0x30] sm:$0xff]
    %v51 = vld [vmem:[%s2 + $0x38] sm:$0xff]
    %v52 = vld [vmem:[%s2 + $0x40] sm:$0xff]
    %v53 = vld [vmem:[%s2 + $0x48] sm:$0xff]
    %v54 = vld [vmem:[%s2 + $0x50] sm:$0xff]
    %v55 = vld [vmem:[%s2 + $0x58] sm:$0xff]
    %v56 = vld [vmem:[%s2 + $0x60] sm:$0xff]
    %v57 = vld [vmem:[%s2 + $0x68] sm:$0xff]
    %v58 = vld [vmem:[%s2 + $0x70] sm:$0xff]
    %v59 = vld [vmem:[%s2 + $0x78] sm:$0xff]
    %v60 = vld [vmem:[%s3] sm:$0xf]
    %v61 = vld [vmem:[%s3 + $0x4] sm:$0xf]
    %v62 = vld [vmem:[%s3 + $0x8] sm:$0xf]
    %v63 = vld [vmem:[%s3 + $0xc] sm:$0xf]
    %v64 = vld [vmem:[%s3 + $0x10] sm:$0xf]
    %v65 = vld [vmem:[%s3 + $0x14] sm:$0xf]
    %v66 = vld [vmem:[%s3 + $0x18] sm:$0xf]
    %v67 = vld [vmem:[%s3 + $0x1c] sm:$0xf]
    %v68 = vld [vmem:[%s4] sm:$0xff]
    %v69 = vld [vmem:[%s4 + $0x8] sm:$0xff]
    %v70 = vld [vmem:[%s4 + $0x10] sm:$0xff]
    %v71 = vld [vmem:[%s4 + $0x18] sm:$0xff]
    %v72 = vld [vmem:[%s4 + $0x20] sm:$0xff]
    %v73 = vld [vmem:[%s4 + $0x28] sm:$0xff]
    %v74 = vld [vmem:[%s4 + $0x30] sm:$0xff]
    %v75 = vld [vmem:[%s4 + $0x38] sm:$0xff]
    %v76 = vld [vmem:[%s5] sm:$0xf]
    %v77 = vld [vmem:[%s6] sm:$0x7f]
    %v78 = vld [vmem:[%s0] sm:$0xff]
    %v79 = vpack.c.bf16 %v78, %v78
    %81 = vset.pattern.permute.xlu0 0
    %82 = vperm.xlu0 %81, %v44
    %v83 = vpop.permute.xlu0 %82
    %86 = vset.pattern.permute.xlu0 0
    %87 = vperm.xlu0 %86, %v45
    %v88 = vpop.permute.xlu0 %87
    %91 = vset.pattern.permute.xlu0 0
    %92 = vperm.xlu0 %91, %v46
    %v93 = vpop.permute.xlu0 %92
    %96 = vset.pattern.permute.xlu0 0
    %97 = vperm.xlu0 %96, %v47
    %v98 = vpop.permute.xlu0 %97
    %101 = vset.pattern.permute.xlu0 0
    %102 = vperm.xlu0 %101, %v48
    %v103 = vpop.permute.xlu0 %102
    %106 = vset.pattern.permute.xlu0 0
    %107 = vperm.xlu0 %106, %v49
    %v108 = vpop.permute.xlu0 %107
    %111 = vset.pattern.permute.xlu0 0
    %112 = vperm.xlu0 %111, %v50
    %v113 = vpop.permute.xlu0 %112
    %116 = vset.pattern.permute.xlu0 0
    %117 = vperm.xlu0 %116, %v51
    %v118 = vpop.permute.xlu0 %117
    %121 = vset.pattern.permute.xlu0 0
    %122 = vperm.xlu0 %121, %v52
    %v123 = vpop.permute.xlu0 %122
    %126 = vset.pattern.permute.xlu0 0
    %127 = vperm.xlu0 %126, %v53
    %v128 = vpop.permute.xlu0 %127
    %131 = vset.pattern.permute.xlu0 0
    %132 = vperm.xlu0 %131, %v54
    %v133 = vpop.permute.xlu0 %132
    %136 = vset.pattern.permute.xlu0 0
    %137 = vperm.xlu0 %136, %v55
    %v138 = vpop.permute.xlu0 %137
    %141 = vset.pattern.permute.xlu0 0
    %142 = vperm.xlu0 %141, %v56
    %v143 = vpop.permute.xlu0 %142
    %146 = vset.pattern.permute.xlu0 0
    %147 = vperm.xlu0 %146, %v57
    %v148 = vpop.permute.xlu0 %147
    %151 = vset.pattern.permute.xlu0 0
    %152 = vperm.xlu0 %151, %v58
    %v153 = vpop.permute.xlu0 %152
    %156 = vset.pattern.permute.xlu0 0
    %157 = vperm.xlu0 %156, %v59
    %v158 = vpop.permute.xlu0 %157
    %v176 = vunpack.c.l.b16 %v28
    %v177 = vunpack.c.l.b16 %v29
    %v178 = vunpack.c.l.b16 %v30
    %v179 = vunpack.c.l.b16 %v31
    %v180 = vunpack.c.l.b16 %v32
    %v181 = vunpack.c.l.b16 %v33
    %v182 = vunpack.c.l.b16 %v34
    %v183 = vunpack.c.l.b16 %v35
    %v184 = vunpack.c.l.b16 %v36
    %v185 = vunpack.c.l.b16 %v37
    %v186 = vunpack.c.l.b16 %v38
    %v187 = vunpack.c.l.b16 %v39
    %v188 = vunpack.c.l.b16 %v40
    %v189 = vunpack.c.l.b16 %v41
    %v190 = vunpack.c.l.b16 %v42
    %v191 = vunpack.c.l.b16 %v43
    %v192 = vpack.c.b16 %v177, %v176
    %v193 = vpack.c.b16 %v179, %v178
    %v194 = vpack.c.b16 %v181, %v180
    %v195 = vpack.c.b16 %v183, %v182
    %v196 = vpack.c.b16 %v185, %v184
    %v197 = vpack.c.b16 %v187, %v186
    %v198 = vpack.c.b16 %v189, %v188
    %v199 = vpack.c.b16 %v191, %v190
    %vm200 = vcmask 89088
    %v202 = vsel %vm200, %v192, 0
    %v205 = vsel %vm200, %v193, 0
    %v208 = vsel %vm200, %v194, 0
    %v211 = vsel %vm200, %v195, 0
    %v214 = vsel %vm200, %v196, 0
    %v217 = vsel %vm200, %v197, 0
    %v220 = vsel %vm200, %v198, 0
    %v223 = vsel %vm200, %v199, 0
    %v226 = vsel %vm200, %v79, 0
    %228 = vmatprep.subr.bf16.mxu0 0
    %229 = vmatpush1.bf16.xpose.msra.mxu0 %v226
    %230 = vmatprep.subr.bf16.mxu0 0
    %231 = vmatpush1.bf16.xpose.msra.mxu0 0
    %232 = vmatprep.subr.bf16.mxu0 0
    %233 = vmatpush1.bf16.xpose.msra.mxu0 0
    %234 = vmatprep.subr.bf16.mxu0 0
    %235 = vmatpush1.bf16.xpose.msra.mxu0 0
    %236 = vmatprep.subr.bf16.mxu0 0
    %237 = vmatpush1.bf16.xpose.msra.mxu0 0
    %238 = vmatprep.subr.bf16.mxu0 0
    %239 = vmatpush1.bf16.xpose.msra.mxu0 0
    %240 = vmatprep.subr.bf16.mxu0 0
    %241 = vmatpush1.bf16.xpose.msra.mxu0 0
    %242 = vmatprep.subr.bf16.mxu0 0
    %243 = vmatpush1.bf16.xpose.msra.mxu0 0
    %244 = vmatprep.subr.bf16.mxu0 0
    %245 = vmatpush1.bf16.xpose.msra.mxu0 0
    %246 = vmatprep.subr.bf16.mxu0 0
    %247 = vmatpush1.bf16.xpose.msra.mxu0 0
    %248 = vmatprep.subr.bf16.mxu0 0
    %249 = vmatpush1.bf16.xpose.msra.mxu0 0
    %250 = vmatprep.subr.bf16.mxu0 0
    %251 = vmatpush1.bf16.xpose.msra.mxu0 0
    %252 = vmatprep.subr.bf16.mxu0 0
    %253 = vmatpush1.bf16.xpose.msra.mxu0 0
    %254 = vmatprep.subr.bf16.mxu0 0
    %255 = vmatpush1.bf16.xpose.msra.mxu0 0
    %256 = vmatprep.subr.bf16.mxu0 0
    %257 = vmatpush1.bf16.xpose.msra.mxu0 0
    %258 = vmatprep.subr.bf16.mxu0 0
    %259 = vmatpush1.bf16.xpose.msra.mxu0 0
    %260 = vmatprep.mubr.bf16.mxu0 0
    %261 = vmatmul.mubr.bf16.gmra.mrb[0].mxu0 %v202
    %v262 = vpop.f32.mrb[0].mxu0
    %v263 = vadd.f32 %v83, %v262
    %v264 = vpop.f32.mrb[0].mxu0
    %v265 = vpop.f32.mrb[0].mxu0
    %v266 = vadd.f32 %v88, %v265
    %v267 = vpop.f32.mrb[0].mxu0
    %268 = vmatprep.mubr.bf16.mxu0 0
    %269 = vmatmul.mubr.bf16.gmra.mrb[0].mxu0 %v205
    %v270 = vpop.f32.mrb[0].mxu0
    %v271 = vadd.f32 %v93, %v270
    %v272 = vpop.f32.mrb[0].mxu0
    %v273 = vpop.f32.mrb[0].mxu0
    %v274 = vadd.f32 %v98, %v273
    %v275 = vpop.f32.mrb[0].mxu0
    %276 = vmatprep.mubr.bf16.mxu0 0
    %277 = vmatmul.mubr.bf16.gmra.mrb[0].mxu0 %v208
    %v278 = vpop.f32.mrb[0].mxu0
    %v279 = vadd.f32 %v103, %v278
    %v280 = vpop.f32.mrb[0].mxu0
    %v281 = vpop.f32.mrb[0].mxu0
    %v282 = vadd.f32 %v108, %v281
    %v283 = vpop.f32.mrb[0].mxu0
    %284 = vmatprep.mubr.bf16.mxu0 0
    %285 = vmatmul.mubr.bf16.gmra.mrb[0].mxu0 %v211
    %v286 = vpop.f32.mrb[0].mxu0
    %v287 = vadd.f32 %v113, %v286
    %v288 = vpop.f32.mrb[0].mxu0
    %v289 = vpop.f32.mrb[0].mxu0
    %v290 = vadd.f32 %v118, %v289
    %v291 = vpop.f32.mrb[0].mxu0
    %292 = vmatprep.mubr.bf16.mxu0 0
    %293 = vmatmul.mubr.bf16.gmra.mrb[0].mxu0 %v214
    %v294 = vpop.f32.mrb[0].mxu0
    %v295 = vadd.f32 %v123, %v294
    %v296 = vpop.f32.mrb[0].mxu0
    %v297 = vpop.f32.mrb[0].mxu0
    %v298 = vadd.f32 %v128, %v297
    %v299 = vpop.f32.mrb[0].mxu0
    %300 = vmatprep.mubr.bf16.mxu0 0
    %301 = vmatmul.mubr.bf16.gmra.mrb[0].mxu0 %v217
    %v302 = vpop.f32.mrb[0].mxu0
    %v303 = vadd.f32 %v133, %v302
    %v304 = vpop.f32.mrb[0].mxu0
    %v305 = vpop.f32.mrb[0].mxu0
    %v306 = vadd.f32 %v138, %v305
    %v307 = vpop.f32.mrb[0].mxu0
    %308 = vmatprep.mubr.bf16.mxu0 0
    %309 = vmatmul.mubr.bf16.gmra.mrb[0].mxu0 %v220
    %v310 = vpop.f32.mrb[0].mxu0
    %v311 = vadd.f32 %v143, %v310
    %v312 = vpop.f32.mrb[0].mxu0
    %v313 = vpop.f32.mrb[0].mxu0
    %v314 = vadd.f32 %v148, %v313
    %v315 = vpop.f32.mrb[0].mxu0
    %316 = vmatprep.mubr.bf16.mxu0 0
    %317 = vmatmul.mubr.bf16.gmra.mrb[0].mxu0 %v223
    %v318 = vpop.f32.mrb[0].mxu0
    %v319 = vadd.f32 %v153, %v318
    %v320 = vpop.f32.mrb[0].mxu0
    %v321 = vpop.f32.mrb[0].mxu0
    %v322 = vadd.f32 %v158, %v321
    %v323 = vpop.f32.mrb[0].mxu0
    %324 = vdwg.mxu0
    %v325 = vmax.f32 %v263, 0.0
    %v326 = vmax.f32 %v266, 0.0
    %v327 = vmax.f32 %v271, 0.0
    %v328 = vmax.f32 %v274, 0.0
    %v329 = vmax.f32 %v279, 0.0
    %v330 = vmax.f32 %v282, 0.0
    %v331 = vmax.f32 %v287, 0.0
    %v332 = vmax.f32 %v290, 0.0
    %v333 = vmax.f32 %v295, 0.0
    %v334 = vmax.f32 %v298, 0.0
    %v335 = vmax.f32 %v303, 0.0
    %v336 = vmax.f32 %v306, 0.0
    %v337 = vmax.f32 %v311, 0.0
    %v338 = vmax.f32 %v314, 0.0
    %v339 = vmax.f32 %v319, 0.0
    %v340 = vmax.f32 %v322, 0.0
    %v341 = vpack.c.bf16 %v326, %v325
    %v342 = vpack.c.bf16 %v328, %v327
    %v343 = vpack.c.bf16 %v330, %v329
    %v344 = vpack.c.bf16 %v332, %v331
    %v345 = vpack.c.bf16 %v334, %v333
    %v346 = vpack.c.bf16 %v336, %v335
    %v347 = vpack.c.bf16 %v338, %v337
    %v348 = vpack.c.bf16 %v340, %v339
    %350 = vset.pattern.permute.xlu0 0
    %351 = vperm.xlu0 %350, %v68
    %v352 = vpop.permute.xlu0 %351
    %355 = vset.pattern.permute.xlu0 0
    %356 = vperm.xlu0 %355, %v69
    %v357 = vpop.permute.xlu0 %356
    %360 = vset.pattern.permute.xlu0 0
    %361 = vperm.xlu0 %360, %v70
    %v362 = vpop.permute.xlu0 %361
    %365 = vset.pattern.permute.xlu0 0
    %366 = vperm.xlu0 %365, %v71
    %v367 = vpop.permute.xlu0 %366
    %370 = vset.pattern.permute.xlu0 0
    %371 = vperm.xlu0 %370, %v72
    %v372 = vpop.permute.xlu0 %371
    %375 = vset.pattern.permute.xlu0 0
    %376 = vperm.xlu0 %375, %v73
    %v377 = vpop.permute.xlu0 %376
    %380 = vset.pattern.permute.xlu0 0
    %381 = vperm.xlu0 %380, %v74
    %v382 = vpop.permute.xlu0 %381
    %385 = vset.pattern.permute.xlu0 0
    %386 = vperm.xlu0 %385, %v75
    %v387 = vpop.permute.xlu0 %386
    %v397 = vunpack.c.l.b16 %v60
    %v398 = vunpack.c.l.b16 %v61
    %v399 = vunpack.c.l.b16 %v62
    %v400 = vunpack.c.l.b16 %v63
    %v401 = vunpack.c.l.b16 %v64
    %v402 = vunpack.c.l.b16 %v65
    %v403 = vunpack.c.l.b16 %v66
    %v404 = vunpack.c.l.b16 %v67
    %v405 = vpack.c.b16 %v398, %v397
    %v406 = vpack.c.b16 %v400, %v399
    %v407 = vpack.c.b16 %v402, %v401
    %v408 = vpack.c.b16 %v404, %v403
    %413 = vmatprep.subr.bf16.mxu0 0
    %414 = vmatpush1.bf16.msra.mxu0 %v341
    %415 = vmatprep.subr.bf16.mxu0 0
    %416 = vmatpush1.bf16.msra.mxu0 %v342
    %417 = vmatprep.subr.bf16.mxu0 0
    %418 = vmatpush1.bf16.msra.mxu0 %v343
    %419 = vmatprep.subr.bf16.mxu0 0
    %420 = vmatpush1.bf16.msra.mxu0 %v344
    %421 = vmatprep.subr.bf16.mxu0 0
    %422 = vmatpush1.bf16.msra.mxu0 %v345
    %423 = vmatprep.subr.bf16.mxu0 0
    %424 = vmatpush1.bf16.msra.mxu0 %v346
    %425 = vmatprep.subr.bf16.mxu0 0
    %426 = vmatpush1.bf16.msra.mxu0 %v347
    %427 = vmatprep.subr.bf16.mxu0 0
    %428 = vmatpush1.bf16.msra.mxu0 %v348
    %429 = vmatprep.subr.bf16.mxu0 0
    %430 = vmatpush1.bf16.msra.mxu0 0
    %431 = vmatprep.subr.bf16.mxu0 0
    %432 = vmatpush1.bf16.msra.mxu0 0
    %433 = vmatprep.subr.bf16.mxu0 0
    %434 = vmatpush1.bf16.msra.mxu0 0
    %435 = vmatprep.subr.bf16.mxu0 0
    %436 = vmatpush1.bf16.msra.mxu0 0
    %437 = vmatprep.subr.bf16.mxu0 0
    %438 = vmatpush1.bf16.msra.mxu0 0
    %439 = vmatprep.subr.bf16.mxu0 0
    %440 = vmatpush1.bf16.msra.mxu0 0
    %441 = vmatprep.subr.bf16.mxu0 0
    %442 = vmatpush1.bf16.msra.mxu0 0
    %443 = vmatprep.subr.bf16.mxu0 0
    %444 = vmatpush1.bf16.msra.mxu0 0
    %445 = vmatprep.mubr.bf16.mxu0 0
    %446 = vmatmul.mubr.bf16.gmra.mrb[0].mxu0 %v405
    %v447 = vpop.f32.mrb[0].mxu0
    %v448 = vadd.f32 %v352, %v447
    %v449 = vpop.f32.mrb[0].mxu0
    %v450 = vpop.f32.mrb[0].mxu0
    %v451 = vadd.f32 %v357, %v450
    %v452 = vpop.f32.mrb[0].mxu0
    %453 = vmatprep.mubr.bf16.mxu0 0
    %454 = vmatmul.mubr.bf16.gmra.mrb[0].mxu0 %v406
    %v455 = vpop.f32.mrb[0].mxu0
    %v456 = vadd.f32 %v362, %v455
    %v457 = vpop.f32.mrb[0].mxu0
    %v458 = vpop.f32.mrb[0].mxu0
    %v459 = vadd.f32 %v367, %v458
    %v460 = vpop.f32.mrb[0].mxu0
    %461 = vmatprep.mubr.bf16.mxu0 0
    %462 = vmatmul.mubr.bf16.gmra.mrb[0].mxu0 %v407
    %v463 = vpop.f32.mrb[0].mxu0
    %v464 = vadd.f32 %v372, %v463
    %v465 = vpop.f32.mrb[0].mxu0
    %v466 = vpop.f32.mrb[0].mxu0
    %v467 = vadd.f32 %v377, %v466
    %v468 = vpop.f32.mrb[0].mxu0
    %469 = vmatprep.mubr.bf16.mxu0 0
    %470 = vmatmul.mubr.bf16.gmra.mrb[0].mxu0 %v408
    %v471 = vpop.f32.mrb[0].mxu0
    %v472 = vadd.f32 %v382, %v471
    %v473 = vpop.f32.mrb[0].mxu0
    %v474 = vpop.f32.mrb[0].mxu0
    %v475 = vadd.f32 %v387, %v474
    %v476 = vpop.f32.mrb[0].mxu0
    %477 = vdwg.mxu0
    %v478 = vmax.f32 %v448, 0.0
    %v479 = vmax.f32 %v451, 0.0
    %v480 = vmax.f32 %v456, 0.0
    %v481 = vmax.f32 %v459, 0.0
    %v482 = vmax.f32 %v464, 0.0
    %v483 = vmax.f32 %v467, 0.0
    %v484 = vmax.f32 %v472, 0.0
    %v485 = vmax.f32 %v475, 0.0
    %v486 = vpack.c.bf16 %v479, %v478
    %v487 = vpack.c.bf16 %v481, %v480
    %v488 = vpack.c.bf16 %v483, %v482
    %v489 = vpack.c.bf16 %v485, %v484
    %491 = vset.pattern.permute.xlu0 0
    %492 = vperm.xlu0 %491, %v77
    %v493 = vpop.permute.xlu0 %492
    %vm495 = vcmask 523264
    %v497 = vsel %vm495, %v76, 0
    %499 = vmatprep.subr.bf16.mxu0 0
    %500 = vmatpush1.bf16.msra.mxu0 %v486
    %501 = vmatprep.subr.bf16.mxu0 0
    %502 = vmatpush1.bf16.msra.mxu0 %v487
    %503 = vmatprep.subr.bf16.mxu0 0
    %504 = vmatpush1.bf16.msra.mxu0 %v488
    %505 = vmatprep.subr.bf16.mxu0 0
    %506 = vmatpush1.bf16.msra.mxu0 %v489
    %507 = vmatprep.subr.bf16.mxu0 0
    %508 = vmatpush1.bf16.msra.mxu0 0
    %509 = vmatprep.subr.bf16.mxu0 0
    %510 = vmatpush1.bf16.msra.mxu0 0
    %511 = vmatprep.subr.bf16.mxu0 0
    %512 = vmatpush1.bf16.msra.mxu0 0
    %513 = vmatprep.subr.bf16.mxu0 0
    %514 = vmatpush1.bf16.msra.mxu0 0
    %515 = vmatprep.subr.bf16.mxu0 0
    %516 = vmatpush1.bf16.msra.mxu0 0
    %517 = vmatprep.subr.bf16.mxu0 0
    %518 = vmatpush1.bf16.msra.mxu0 0
    %519 = vmatprep.subr.bf16.mxu0 0
    %520 = vmatpush1.bf16.msra.mxu0 0
    %521 = vmatprep.subr.bf16.mxu0 0
    %522 = vmatpush1.bf16.msra.mxu0 0
    %523 = vmatprep.subr.bf16.mxu0 0
    %524 = vmatpush1.bf16.msra.mxu0 0
    %525 = vmatprep.subr.bf16.mxu0 0
    %526 = vmatpush1.bf16.msra.mxu0 0
    %527 = vmatprep.subr.bf16.mxu0 0
    %528 = vmatpush1.bf16.msra.mxu0 0
    %529 = vmatprep.subr.bf16.mxu0 0
    %530 = vmatpush1.bf16.msra.mxu0 0
    %531 = vmatprep.mubr.bf16.mxu0 0
    %532 = vmatmul.mubr.bf16.gmra.mrb[0].mxu0 %v497
    %v533 = vpop.f32.mrb[0].mxu0
    %v534 = vadd.f32 %v493, %v533
    %v535 = vpop.f32.mrb[0].mxu0
    %v536 = vpop.f32.mrb[0].mxu0
    %v537 = vpop.f32.mrb[0].mxu0
    %538 = vdwg.mxu0
    %vm539 = vcmask 63488
    %540 = vst.msk [vmem:[#allocation2] sm:$0x7f] %vm539, %v534
    // Predicated region
    $region30: #{tpu_custom_call.1} parent=1 // pred_check
      _
    $region31: #{tpu_custom_call.1} parent=1 // pred_check_branch
      %542 = sbr.rel (0) target = $region33
    $region32: #{tpu_custom_call.1} parent=1 // pred_region
      %s544 = ssub.s32 128, 128
      %545 = vsyncadd [#allocation3], %s544
      %s547 = sshll.u32 [#allocation2], 4
      %s548 = int_to_ptr.vmem [resolvable:$true] %s547
      %550 = dma.vmem_to_hbm [thread:$0]  %s548, 128, %s7, [#allocation3]
    $region33: #{tpu_custom_call.1} parent=1 // pred_fallthru
      _
    // Predicated region
    $region34: #{tpu_custom_call.1} parent=1 // pred_check
      _
    $region35: #{tpu_custom_call.1} parent=1 // pred_check_branch
      %552 = sbr.rel (0) target = $region37
    $region36: #{tpu_custom_call.1} parent=1 // pred_region
      %553 = dma.done [#allocation3], 128
    $region37: #{tpu_custom_call.1} parent=1 // pred_fallthru
      _
    %554 = vsyncpa [#allocation3], 1

</llo_original>
